<compile_context>
chip_gen: v6e
topology: v6e:2x2x1
jax: 0.10.0
libtpu: 0.0.40
codegen_flags: <defaults>
</compile_context>

<pallas_src>
import functools

import jax
import jax.numpy as jnp
from jax.experimental import pallas as pl
from jax.experimental.pallas import tpu as pltpu

G = -9.81           # gravitational constant used by the module
LANES = 128         # TPU lane width
SUBLANES = 8        # f32 sublane tiling
MAX_BLOCK_ROWS = 2048   # 2048x128 f32 = 1 MiB in / 3 MiB out per grid step


def _round_up(x, m):
    return ((x + m - 1) // m) * m


def _choose_block_rows(rows, max_block_rows):
    """Pick a block size that amortizes per-step overhead but keeps >=2 grid
    steps (megacore sharding on v7x) whenever there is enough work."""
    two_way = _round_up(pl.cdiv(rows, 2), SUBLANES)
    return max(SUBLANES, min(max_block_rows, two_way, rows))


def _parabola_kernel(params_ref, t_ref, out_ref):
    # params_ref: SMEM f32[6] = [wx, bx, wy, by, wz, bz]
    # t_ref:      VMEM f32[block_rows, 128]   (lane-dense time samples)
    # out_ref:    VMEM f32[3, block_rows, 128] (planar x/y/z slabs)
    t = t_ref[...]

    wx = params_ref[0]
    bx = params_ref[1]
    wy = params_ref[2]
    by = params_ref[3]
    wz = params_ref[4]
    bz = params_ref[5]

    out_ref[0] = t * wx + bx                       # fc_x(t)
    out_ref[1] = t * wy + by                       # fc_y(t)
    out_ref[2] = t * (wz + (0.5 * G) * t) + bz     # fc_z(t) + 0.5*g*t^2


@functools.partial(jax.jit, static_argnames=("max_block_rows", "planar"))
def parabola_forward(t, params, max_block_rows=MAX_BLOCK_ROWS, planar=False):
    """t: (N, 1) or (N,) float, params: (6,) float.

    Returns (N, 3) float32 (torch.cat(dim=1) semantics), or (3, N) if
    planar=True (skips the final interleave entirely)."""
    n = t.shape[0]
    t_flat = t.reshape(-1).astype(jnp.float32)
    params = params.astype(jnp.float32)

    # Pad only to an (8, 128) boundary so the lane-dense reshape is legal;
    # the ragged trailing grid block is masked by Pallas on writeback.
    rows = _round_up(pl.cdiv(n, LANES), SUBLANES)
    padded_n = rows * LANES
    block_rows = _choose_block_rows(rows, max_block_rows)
    num_blocks = pl.cdiv(rows, block_rows)

    t_padded = jnp.pad(t_flat, (0, padded_n - n))   # <= 1023 zero elements
    t2d = t_padded.reshape(rows, LANES)

    out = pl.pallas_call(
        _parabola_kernel,
        out_shape=jax.ShapeDtypeStruct((3, rows, LANES), jnp.float32),
        grid=(num_blocks,),
        in_specs=[
            pl.BlockSpec(memory_space=pltpu.SMEM),                # scalar params
            pl.BlockSpec((block_rows, LANES), lambda i: (i, 0)),  # lane-dense t
        ],
        out_specs=pl.BlockSpec((3, block_rows, LANES), lambda i: (0, i, 0)),
        compiler_params=pltpu.CompilerParams(
            dimension_semantics=("parallel",)),
        cost_estimate=pl.CostEstimate(
            flops=8 * padded_n, transcendentals=0,
            bytes_accessed=16 * padded_n),
    )(params, t2d)

    # Planar (3, padded_n) -> trim padding; interleave to (N, 3) only if asked.
    planar_out = out.reshape(3, padded_n)[:, :n]
    if planar:
        return planar_out
    # Under jit, slice + transpose fuse into a single copy (or into the
    # consumer's first op when this function is inlined into a larger jit).
    return planar_out.T


def reference_forward(t, params):
    t = t.astype(jnp.float32).reshape(-1, 1)
    wx, bx, wy, by, wz, bz = [params[i] for i in range(6)]
    pred_x = t * wx + bx
    pred_y = t * wy + by
    pred_z = t * wz + bz + 0.5 * G * t ** 2
    return jnp.concatenate((pred_x, pred_y, pred_z), axis=1)


if __name__ == "__main__":
    key = jax.random.PRNGKey(0)
    k_t, k_t2 = jax.random.split(key)

    # Deterministic parameter init: [wx, bx, wy, by, wz, bz]
    # (plays the role of fc_x/fc_y/fc_z weights & biases, i.e. vx,px,vy,py,vz,pz)
    params = jnp.array([1.5, 0.2, -0.7, 0.4, 3.0, 1.0], dtype=jnp.float32)

    # Small demo shape consistent with the module: a short sequence of times.
    N = 8
    t = jax.random.uniform(k_t, (N, 1), dtype=jnp.float32, minval=0.0, maxval=2.0)
    out = jax.block_until_ready(parabola_forward(t, params))
    ref = reference_forward(t, params)
    assert out.shape == (N, 3), out.shape
    assert jnp.allclose(out, ref, atol=1e-5, rtol=1e-5), (out, ref)

    # Second check: non-multiple-of-128 N with a small block size to exercise
    # the multi-step pipelined grid and the ragged trailing block + trim.
    N2 = 3000
    t2 = jax.random.uniform(k_t2, (N2, 1), dtype=jnp.float32, minval=0.0, maxval=2.0)
    out2 = jax.block_until_ready(parabola_forward(t2, params, max_block_rows=8))
    ref2 = reference_forward(t2, params)
    assert out2.shape == (N2, 3), out2.shape
    assert jnp.allclose(out2, ref2, atol=1e-5, rtol=1e-5)

    # Third check: planar (3, N) fast path (no interleave epilogue).
    out3 = jax.block_until_ready(parabola_forward(t2, params, planar=True))
    assert out3.shape == (3, N2), out3.shape
    assert jnp.allclose(out3.T, ref2, atol=1e-5, rtol=1e-5)

    print("KERNEL_OK")
</pallas_src>

<mosaic_0001>
module attributes {stable_mosaic.version = 11 : i64} {
  func.func @_parabola_kernel(%arg0: i32, %arg1: memref<6xf32, #tpu.memory_space<smem>>, %arg2: memref<8x128xf32, #tpu.memory_space<vmem>>, %arg3: memref<3x8x128xf32, #tpu.memory_space<vmem>>) attributes {dimension_semantics = [#tpu.dimension_semantics<parallel>], iteration_bounds = array<i64: 1>, scalar_prefetch = 0 : i64, scratch_operands = 0 : i64, tpu.core_type = #tpu.core_type<tc>, window_params = [{transform_indices = @transform_0, window_bounds = array<i64: 6>}, {transform_indices = @transform_1, window_bounds = array<i64: 8, 128>}, {transform_indices = @transform_2, window_bounds = array<i64: 3, 8, 128>}]} {
    %c0 = arith.constant 0 : index
    %c0_0 = arith.constant 0 : index
    %0 = vector.load %arg2[%c0, %c0_0] : memref<8x128xf32, #tpu.memory_space<vmem>>, vector<8x128xf32>
    %c0_1 = arith.constant 0 : index
    %1 = memref.load %arg1[%c0_1] : memref<6xf32, #tpu.memory_space<smem>>
    %c1 = arith.constant 1 : index
    %2 = memref.load %arg1[%c1] : memref<6xf32, #tpu.memory_space<smem>>
    %c2 = arith.constant 2 : index
    %3 = memref.load %arg1[%c2] : memref<6xf32, #tpu.memory_space<smem>>
    %c3 = arith.constant 3 : index
    %4 = memref.load %arg1[%c3] : memref<6xf32, #tpu.memory_space<smem>>
    %c4 = arith.constant 4 : index
    %5 = memref.load %arg1[%c4] : memref<6xf32, #tpu.memory_space<smem>>
    %c5 = arith.constant 5 : index
    %6 = memref.load %arg1[%c5] : memref<6xf32, #tpu.memory_space<smem>>
    %7 = vector.broadcast %1 : f32 to vector<8x128xf32>
    %8 = arith.mulf %0, %7 : vector<8x128xf32>
    %9 = vector.broadcast %2 : f32 to vector<8x128xf32>
    %10 = arith.addf %8, %9 : vector<8x128xf32>
    %c0_2 = arith.constant 0 : index
    %c0_3 = arith.constant 0 : index
    %c0_4 = arith.constant 0 : index
    %11 = vector.load %arg3[%c0_2, %c0_3, %c0_4] : memref<3x8x128xf32, #tpu.memory_space<vmem>>, vector<1x8x128xf32>
    %12 = vector.shape_cast %11 : vector<1x8x128xf32> to vector<8x128xf32>
    %13 = vector.shape_cast %10 : vector<8x128xf32> to vector<1x8x128xf32>
    tpu.vector_store %arg3[%c0_2, %c0_3, %c0_4], %13 {strides = array<i32>} : memref<3x8x128xf32, #tpu.memory_space<vmem>>, vector<1x8x128xf32>,
    %14 = vector.broadcast %3 : f32 to vector<8x128xf32>
    %15 = arith.mulf %0, %14 : vector<8x128xf32>
    %16 = vector.broadcast %4 : f32 to vector<8x128xf32>
    %17 = arith.addf %15, %16 : vector<8x128xf32>
    %c1_5 = arith.constant 1 : index
    %c0_6 = arith.constant 0 : index
    %c0_7 = arith.constant 0 : index
    %18 = vector.load %arg3[%c1_5, %c0_6, %c0_7] : memref<3x8x128xf32, #tpu.memory_space<vmem>>, vector<1x8x128xf32>
    %19 = vector.shape_cast %18 : vector<1x8x128xf32> to vector<8x128xf32>
    %20 = vector.shape_cast %17 : vector<8x128xf32> to vector<1x8x128xf32>
    tpu.vector_store %arg3[%c1_5, %c0_6, %c0_7], %20 {strides = array<i32>} : memref<3x8x128xf32, #tpu.memory_space<vmem>>, vector<1x8x128xf32>,
    %cst = arith.constant -4.905000e+00 : f32
    %21 = vector.broadcast %cst : f32 to vector<8x128xf32>
    %22 = arith.mulf %21, %0 : vector<8x128xf32>
    %23 = vector.broadcast %5 : f32 to vector<8x128xf32>
    %24 = arith.addf %23, %22 : vector<8x128xf32>
    %25 = arith.mulf %0, %24 : vector<8x128xf32>
    %26 = vector.broadcast %6 : f32 to vector<8x128xf32>
    %27 = arith.addf %25, %26 : vector<8x128xf32>
    %c2_8 = arith.constant 2 : index
    %c0_9 = arith.constant 0 : index
    %c0_10 = arith.constant 0 : index
    %28 = vector.load %arg3[%c2_8, %c0_9, %c0_10] : memref<3x8x128xf32, #tpu.memory_space<vmem>>, vector<1x8x128xf32>
    %29 = vector.shape_cast %28 : vector<1x8x128xf32> to vector<8x128xf32>
    %30 = vector.shape_cast %27 : vector<8x128xf32> to vector<1x8x128xf32>
    tpu.vector_store %arg3[%c2_8, %c0_9, %c0_10], %30 {strides = array<i32>} : memref<3x8x128xf32, #tpu.memory_space<vmem>>, vector<1x8x128xf32>,
    return
  }
  func.func @transform_0(%arg0: i32) -> i32 {
    %c0_i32 = arith.constant 0 : i32
    %c0_i32_0 = arith.constant 0 : i32
    return %c0_i32 : i32
  }
  func.func @transform_1(%arg0: i32) -> (i32, i32) {
    %c0_i32 = arith.constant 0 : i32
    %c0_i32_0 = arith.constant 0 : i32
    return %arg0, %c0_i32 : i32, i32
  }
  func.func @transform_2(%arg0: i32) -> (i32, i32, i32) {
    %c0_i32 = arith.constant 0 : i32
    %c0_i32_0 = arith.constant 0 : i32
    %c0_i32_1 = arith.constant 0 : i32
    return %c0_i32, %arg0, %c0_i32_0 : i32, i32, i32
  }
}

</mosaic_0001>

<llo_original>
// kernel: parabola_forward.1
$region0: #{parabola_forward.1}
  #allocation0 [shape = 'u32[]', space=smem, size = 0x4, offset = 0x4, fixed_abs, tag = 'smem constant byte address 0x4 - core index']
  #allocation1 [shape = 'u32[144,128]{1,0:T(1,128)}', space=vmem, size = 0x12000, scoped, tag = 'internal scratch']
  %s0 = inlined_call_operand.vmem [shape: f32[6], index: 0, kind: input, shape index: {}]
  %s1 = inlined_call_operand.vmem [shape: f32[8,128], index: 1, kind: input, shape index: {}]
  %s2 = inlined_call_operand.vmem [shape: f32[3,8,128], index: 2, kind: output, shape index: {}]
  %s3 = sld [smem:[#allocation0]]
  $region22: #{parabola_forward.1} parent=0
    _
  %s5 = ssub.s32 1, %s3
  %s6 = scalar_select 0, %s5, %s3
  $region1: #{parabola_forward.1} parent=0
    #allocation2 [shape = 'u8[512]{0}', space=smem, size = 0x200, scoped, tag = 'input window, operand 0, single buffered']
    #allocation3 [shape = 's32[1]{0}', space=sflag, size = 0x4, scoped, tag = 'scoped memory for parabola_forward.1']
    %7 = vsyncpa [#allocation3], 0
    // Predicated region
    $region2: #{parabola_forward.1} parent=1 // pred_check
      _
    $region3: #{parabola_forward.1} parent=1 // pred_check_branch
      %9 = sbr.rel (0) target = $region5
    $region4: #{parabola_forward.1} parent=1 // pred_region
      %s11 = ssub.s32 16, 16
      %12 = vsyncadd [#allocation3], %s11
      %s14 = sshll.u32 %s0, 4
      %s15 = int_to_ptr.vmem [resolvable:$true] %s14
      %17 = dma.vmem_to_smem %s15, 16, [#allocation2], [#allocation3]
    $region5: #{parabola_forward.1} parent=1 // pred_fallthru
      _
    // Predicated region
    $region6: #{parabola_forward.1} parent=1 // pred_check
      _
    $region7: #{parabola_forward.1} parent=1 // pred_check_branch
      %19 = sbr.rel (0) target = $region9
    $region8: #{parabola_forward.1} parent=1 // pred_region
      _
    $region9: #{parabola_forward.1} parent=1 // pred_fallthru
      _
    // Predicated region
    $region10: #{parabola_forward.1} parent=1 // pred_check
      _
    $region11: #{parabola_forward.1} parent=1 // pred_check_branch
      %21 = sbr.rel (0) target = $region13
    $region12: #{parabola_forward.1} parent=1 // pred_region
      %22 = dma.done [#allocation3], 16
    $region13: #{parabola_forward.1} parent=1 // pred_fallthru
      _
    %23 = sfence
    %v24 = vld [vmem:[%s1] sm:$0xff]
    %s25 = sld [smem:[#allocation2]]
    %s26 = sld [smem:[#allocation2 + $0x1]]
    %s27 = sld [smem:[#allocation2 + $0x2]]
    %s28 = sld [smem:[#allocation2 + $0x3]]
    %s29 = sld [smem:[#allocation2 + $0x4]]
    %s30 = sld [smem:[#allocation2 + $0x5]]
    %v31 = vstv %s25
    %v32 = vmul.f32 %v24, %v31
    %v33 = vstv %s26
    %v34 = vadd.f32 %v32, %v33
    %35 = vst [vmem:[%s2] sm:$0xff] %v34
    %v36 = vstv %s27
    %v37 = vmul.f32 %v24, %v36
    %v38 = vstv %s28
    %v39 = vadd.f32 %v37, %v38
    %s40 = scalar_lea.vmem %s2, 8
    %41 = vst [vmem:[%s40] sm:$0xff] %v39
    %v42 = vmul.f32 %v24, -4.905
    %v43 = vstv %s29
    %v44 = vadd.f32 %v43, %v42
    %v45 = vmul.f32 %v24, %v44
    %v46 = vstv %s30
    %v47 = vadd.f32 %v45, %v46
    %s48 = scalar_lea.vmem %s2, 16
    %49 = vst [vmem:[%s48] sm:$0xff] %v47
    // Predicated region
    $region14: #{parabola_forward.1} parent=1 // pred_check
      _
    $region15: #{parabola_forward.1} parent=1 // pred_check_branch
      %51 = sbr.rel (0) target = $region17
    $region16: #{parabola_forward.1} parent=1 // pred_region
      _
    $region17: #{parabola_forward.1} parent=1 // pred_fallthru
      _
    // Predicated region
    $region18: #{parabola_forward.1} parent=1 // pred_check
      _
    $region19: #{parabola_forward.1} parent=1 // pred_check_branch
      %53 = sbr.rel (0) target = $region21
    $region20: #{parabola_forward.1} parent=1 // pred_region
      _
    $region21: #{parabola_forward.1} parent=1 // pred_fallthru
      _
    %54 = vsyncpa [#allocation3], 1

</llo_original>
